<compile_context>
chip_gen: v7x
topology: tpu7x:2x2x1
jax: 0.10.0
libtpu: 0.0.40
codegen_flags: <defaults>
</compile_context>

<pallas_src>
import functools

import jax
import jax.numpy as jnp
import numpy as np
from jax import lax
from jax.experimental import pallas as pl
from jax.experimental.pallas import tpu as pltpu


def _mbd_kernel(x_ref, t_ref, s_ref, o_ref, m_scr,
                *, n_valid, i_block, num_i_blocks, tile_j):
    n_pad, bc = m_scr.shape

    # Full-batch M, lane-dense (N_pad, B*C), into a VMEM scratch so the i-loop
    # can slice it with pl.ds.  f32 operands, f32 accumulation on the MXU.
    m_scr[...] = jnp.dot(x_ref[...], t_ref[...],
                         preferred_element_type=jnp.float32)
    # TODO(synk): cast the x/T operands to bf16 here when F/N scale up on
    # v6e/v7x (kept f32 so the tiny matmul stays bit-faithful to the module).

    # Poison padded batch rows so their exp(-norm) contribution underflows to
    # exactly 0 (|m_j - 1e30| sums to ~8e30, exp(-8e30) == 0 in f32).
    if n_valid < n_pad:
        m_scr[n_valid:, :] = jnp.full((n_pad - n_valid, bc), 1e30, jnp.float32)

    # Rows this grid step produces output for.
    j0 = pl.multiple_of(pl.program_id(0) * tile_j, tile_j)
    m_j = m_scr[pl.ds(j0, tile_j), :]                  # (tile_j, B*C)

    s = s_ref[...]                                     # (B*C, B_pad) 0/1 selector

    def i_block_body(blk, acc):
        i0 = pl.multiple_of(blk * i_block, i_block)
        m_i_blk = m_scr[pl.ds(i0, i_block), :]         # (i_block, B*C)
        for r in range(i_block):                       # short static unroll
            diff = jnp.abs(m_j - m_i_blk[r:r + 1, :])  # VPU, lane-dense
            norm = jnp.dot(diff, s,                    # MXU: sum over kernel_dims
                           preferred_element_type=jnp.float32)
            acc = acc + jnp.exp(-norm)                 # EUP
        return acc

    acc0 = jnp.zeros((tile_j, s.shape[1]), jnp.float32)
    acc = lax.fori_loop(0, num_i_blocks, i_block_body, acc0,
                        unroll=min(8, num_i_blocks))

    # Remove the self term exp(0) = 1; single full-width lane-dense store.
    o_ref[...] = (acc - 1.0).astype(o_ref.dtype)


def minibatch_discrimination(x, T):
    """x: (N, in_features); T: (in_features, out_features, kernel_dims)."""
    n, in_features = x.shape
    in_f2, out_features, kernel_dims = T.shape
    assert in_f2 == in_features
    bc = out_features * kernel_dims

    i_block = 8                                          # f32 sublane count
    n_pad = max(i_block, -(-n // i_block) * i_block)     # round N up to 8
    b_pad = -(-out_features // 128) * 128                # lane-dense output width
    tile_j = next(t for t in (512, 256, 128, 64, 32, 16, 8) if n_pad % t == 0)

    x_pad = jnp.zeros((n_pad, in_features), x.dtype).at[:n, :].set(x)
    t_flat = T.reshape(in_features, bc)                  # == T.view(F, -1)

    # Constant block-diagonal selector: S[b*C + c, b] = 1, so |diff| @ S sums
    # the kernel_dims axis on the MXU without any (N, B, C) reshape.
    s_np = np.kron(np.eye(out_features, dtype=np.float32),
                   np.ones((kernel_dims, 1), dtype=np.float32))   # (B*C, B)
    s_np = np.pad(s_np, ((0, 0), (0, b_pad - out_features)))
    s = jnp.asarray(s_np)

    kernel = functools.partial(
        _mbd_kernel,
        n_valid=n,
        i_block=i_block,
        num_i_blocks=n_pad // i_block,
        tile_j=tile_j,
    )

    flops = (2 * n_pad * in_features * bc
             + n_pad * n_pad * (2 * bc + 2 * bc * b_pad))
    o_b_pad = pl.pallas_call(
        kernel,
        out_shape=jax.ShapeDtypeStruct((n_pad, b_pad), jnp.float32),
        grid=(n_pad // tile_j,),
        in_specs=[
            pl.BlockSpec((n_pad, in_features), lambda j: (0, 0)),   # x (full batch)
            pl.BlockSpec((in_features, bc), lambda j: (0, 0)),      # T flat
            pl.BlockSpec((bc, b_pad), lambda j: (0, 0)),            # selector S
        ],
        out_specs=pl.BlockSpec((tile_j, b_pad), lambda j: (j, 0)),
        scratch_shapes=[pltpu.VMEM((n_pad, bc), jnp.float32)],
        compiler_params=pltpu.CompilerParams(
            dimension_semantics=("parallel",)),
        cost_estimate=pl.CostEstimate(
            flops=flops,
            transcendentals=n_pad * n_pad * b_pad,
            bytes_accessed=4 * (n_pad * in_features + in_features * bc
                                + bc * b_pad + n_pad * b_pad)),
    )(x_pad, t_flat, s)

    # torch.cat([x, o_b], dim=1) — done outside the kernel so the kernel's
    # store stays full-width/unmasked and x never round-trips through VMEM.
    return jnp.concatenate([x, o_b_pad[:n, :out_features]], axis=1)


def _reference(x, T):
    in_features, out_features, kernel_dims = T.shape
    m = x @ T.reshape(in_features, -1)
    m = m.reshape(-1, out_features, kernel_dims)
    M = m[None, :, :, :]           # (1, N, B, C)
    M_T = m[:, None, :, :]         # (N, 1, B, C)
    norm = jnp.abs(M - M_T).sum(3)
    norm_e = jnp.exp(-norm)
    o_b = norm_e.sum(0) - 1.0
    return jnp.concatenate([x, o_b], axis=1)


if __name__ == "__main__":
    # Module hyper-parameters (small, consistent with the forward pass).
    N = 4
    IN_FEATURES = 32
    OUT_FEATURES = 16
    KERNEL_DIMS = 8

    key = jax.random.PRNGKey(0)
    kx, kt = jax.random.split(key)
    x = jax.random.normal(kx, (N, IN_FEATURES), dtype=jnp.float32)
    # nn.init.normal_(self.T, 0, 1) -- deterministic standard-normal init.
    T = jax.random.normal(kt, (IN_FEATURES, OUT_FEATURES, KERNEL_DIMS),
                          dtype=jnp.float32)

    out = jax.block_until_ready(minibatch_discrimination(x, T))
    ref = jax.block_until_ready(_reference(x, T))
    np.testing.assert_allclose(np.asarray(out), np.asarray(ref),
                               rtol=1e-4, atol=1e-5)

    print("KERNEL_OK")
</pallas_src>

<mosaic_0001>
module attributes {stable_mosaic.version = 11 : i64} {
  func.func @_mbd_kernel(%arg0: i32, %arg1: memref<8x32xf32, #tpu.memory_space<vmem>>, %arg2: memref<32x128xf32, #tpu.memory_space<vmem>>, %arg3: memref<128x128xf32, #tpu.memory_space<vmem>>, %arg4: memref<8x128xf32, #tpu.memory_space<vmem>>, %arg5: memref<8x128xf32, #tpu.memory_space<vmem>>) attributes {dimension_semantics = [#tpu.dimension_semantics<parallel>], iteration_bounds = array<i64: 1>, scalar_prefetch = 0 : i64, scratch_operands = 1 : i64, tpu.core_type = #tpu.core_type<tc>, window_params = [{pipeline_mode = #tpu.pipeline_mode<synchronous>, transform_indices = @transform_0, window_bounds = array<i64: 8, 32>}, {pipeline_mode = #tpu.pipeline_mode<synchronous>, transform_indices = @transform_1, window_bounds = array<i64: 32, 128>}, {pipeline_mode = #tpu.pipeline_mode<synchronous>, transform_indices = @transform_2, window_bounds = array<i64: 128, 128>}, {transform_indices = @transform_3, window_bounds = array<i64: 8, 128>}]} {
    %c0 = arith.constant 0 : index
    %c0_0 = arith.constant 0 : index
    %0 = vector.load %arg1[%c0, %c0_0] : memref<8x32xf32, #tpu.memory_space<vmem>>, vector<8x32xf32>
    %c0_1 = arith.constant 0 : index
    %c0_2 = arith.constant 0 : index
    %1 = vector.load %arg2[%c0_1, %c0_2] : memref<32x128xf32, #tpu.memory_space<vmem>>, vector<32x128xf32>
    %cst = arith.constant dense<0.000000e+00> : vector<8x128xf32>
    %2 = tpu.matmul %0, %1, %cst {dimension_numbers = #tpu.dot_dimension_numbers<[1], [0], [0], [1], [0, 0, 1, 1], [], []>} : vector<8x32xf32>, vector<32x128xf32>, vector<8x128xf32> -> vector<8x128xf32>
    %c0_3 = arith.constant 0 : index
    %c0_4 = arith.constant 0 : index
    %3 = vector.load %arg5[%c0_3, %c0_4] : memref<8x128xf32, #tpu.memory_space<vmem>>, vector<8x128xf32>
    tpu.vector_store %arg5[%c0_3, %c0_4], %2 {strides = array<i32>} : memref<8x128xf32, #tpu.memory_space<vmem>>, vector<8x128xf32>,
    %cst_5 = arith.constant 1.000000e+30 : f32
    %4 = vector.broadcast %cst_5 : f32 to vector<4x128xf32>
    %c4 = arith.constant 4 : index
    %c0_6 = arith.constant 0 : index
    %5 = vector.load %arg5[%c4, %c0_6] : memref<8x128xf32, #tpu.memory_space<vmem>>, vector<4x128xf32>
    tpu.vector_store %arg5[%c4, %c0_6], %4 {strides = array<i32>} : memref<8x128xf32, #tpu.memory_space<vmem>>, vector<4x128xf32>,
    %c8_i32 = arith.constant 8 : i32
    %6 = arith.muli %arg0, %c8_i32 : i32
    %7 = tpu.assume_multiple %6, 8 : i32
    %8 = arith.index_cast %7 : i32 to index
    %c0_7 = arith.constant 0 : index
    %9 = vector.load %arg5[%8, %c0_7] : memref<8x128xf32, #tpu.memory_space<vmem>>, vector<8x128xf32>
    %c0_8 = arith.constant 0 : index
    %c0_9 = arith.constant 0 : index
    %10 = vector.load %arg3[%c0_8, %c0_9] : memref<128x128xf32, #tpu.memory_space<vmem>>, vector<128x128xf32>
    %cst_10 = arith.constant 0.000000e+00 : f32
    %11 = vector.broadcast %cst_10 : f32 to vector<8x128xf32>
    %c0_i32 = arith.constant 0 : i32
    %c8_i32_11 = arith.constant 8 : i32
    %12 = arith.muli %c0_i32, %c8_i32_11 : i32
    %13 = tpu.assume_multiple %12, 8 : i32
    %14 = arith.index_cast %13 : i32 to index
    %c0_12 = arith.constant 0 : index
    %15 = vector.load %arg5[%14, %c0_12] : memref<8x128xf32, #tpu.memory_space<vmem>>, vector<8x128xf32>
    %16 = vector.extract_strided_slice %15 {offsets = [0, 0], sizes = [1, 128], strides = [1, 1]} : vector<8x128xf32> to vector<1x128xf32>
    %17 = vector.broadcast %16 : vector<1x128xf32> to vector<8x128xf32>
    %18 = arith.subf %9, %17 : vector<8x128xf32>
    %19 = math.absf %18 : vector<8x128xf32>
    %cst_13 = arith.constant dense<0.000000e+00> : vector<8x128xf32>
    %20 = tpu.matmul %19, %10, %cst_13 {dimension_numbers = #tpu.dot_dimension_numbers<[1], [0], [0], [1], [0, 0, 1, 1], [], []>} : vector<8x128xf32>, vector<128x128xf32>, vector<8x128xf32> -> vector<8x128xf32>
    %cst_14 = arith.constant 0.000000e+00 : f32
    %21 = vector.broadcast %cst_14 : f32 to vector<8x128xf32>
    %22 = arith.subf %21, %20 : vector<8x128xf32>
    %23 = math.exp %22 : vector<8x128xf32>
    %24 = arith.addf %11, %23 : vector<8x128xf32>
    %25 = vector.extract_strided_slice %15 {offsets = [1, 0], sizes = [1, 128], strides = [1, 1]} : vector<8x128xf32> to vector<1x128xf32>
    %26 = vector.broadcast %25 : vector<1x128xf32> to vector<8x128xf32>
    %27 = arith.subf %9, %26 : vector<8x128xf32>
    %28 = math.absf %27 : vector<8x128xf32>
    %cst_15 = arith.constant dense<0.000000e+00> : vector<8x128xf32>
    %29 = tpu.matmul %28, %10, %cst_15 {dimension_numbers = #tpu.dot_dimension_numbers<[1], [0], [0], [1], [0, 0, 1, 1], [], []>} : vector<8x128xf32>, vector<128x128xf32>, vector<8x128xf32> -> vector<8x128xf32>
    %cst_16 = arith.constant 0.000000e+00 : f32
    %30 = vector.broadcast %cst_16 : f32 to vector<8x128xf32>
    %31 = arith.subf %30, %29 : vector<8x128xf32>
    %32 = math.exp %31 : vector<8x128xf32>
    %33 = arith.addf %24, %32 : vector<8x128xf32>
    %34 = vector.extract_strided_slice %15 {offsets = [2, 0], sizes = [1, 128], strides = [1, 1]} : vector<8x128xf32> to vector<1x128xf32>
    %35 = vector.broadcast %34 : vector<1x128xf32> to vector<8x128xf32>
    %36 = arith.subf %9, %35 : vector<8x128xf32>
    %37 = math.absf %36 : vector<8x128xf32>
    %cst_17 = arith.constant dense<0.000000e+00> : vector<8x128xf32>
    %38 = tpu.matmul %37, %10, %cst_17 {dimension_numbers = #tpu.dot_dimension_numbers<[1], [0], [0], [1], [0, 0, 1, 1], [], []>} : vector<8x128xf32>, vector<128x128xf32>, vector<8x128xf32> -> vector<8x128xf32>
    %cst_18 = arith.constant 0.000000e+00 : f32
    %39 = vector.broadcast %cst_18 : f32 to vector<8x128xf32>
    %40 = arith.subf %39, %38 : vector<8x128xf32>
    %41 = math.exp %40 : vector<8x128xf32>
    %42 = arith.addf %33, %41 : vector<8x128xf32>
    %43 = vector.extract_strided_slice %15 {offsets = [3, 0], sizes = [1, 128], strides = [1, 1]} : vector<8x128xf32> to vector<1x128xf32>
    %44 = vector.broadcast %43 : vector<1x128xf32> to vector<8x128xf32>
    %45 = arith.subf %9, %44 : vector<8x128xf32>
    %46 = math.absf %45 : vector<8x128xf32>
    %cst_19 = arith.constant dense<0.000000e+00> : vector<8x128xf32>
    %47 = tpu.matmul %46, %10, %cst_19 {dimension_numbers = #tpu.dot_dimension_numbers<[1], [0], [0], [1], [0, 0, 1, 1], [], []>} : vector<8x128xf32>, vector<128x128xf32>, vector<8x128xf32> -> vector<8x128xf32>
    %cst_20 = arith.constant 0.000000e+00 : f32
    %48 = vector.broadcast %cst_20 : f32 to vector<8x128xf32>
    %49 = arith.subf %48, %47 : vector<8x128xf32>
    %50 = math.exp %49 : vector<8x128xf32>
    %51 = arith.addf %42, %50 : vector<8x128xf32>
    %52 = vector.extract_strided_slice %15 {offsets = [4, 0], sizes = [1, 128], strides = [1, 1]} : vector<8x128xf32> to vector<1x128xf32>
    %53 = vector.broadcast %52 : vector<1x128xf32> to vector<8x128xf32>
    %54 = arith.subf %9, %53 : vector<8x128xf32>
    %55 = math.absf %54 : vector<8x128xf32>
    %cst_21 = arith.constant dense<0.000000e+00> : vector<8x128xf32>
    %56 = tpu.matmul %55, %10, %cst_21 {dimension_numbers = #tpu.dot_dimension_numbers<[1], [0], [0], [1], [0, 0, 1, 1], [], []>} : vector<8x128xf32>, vector<128x128xf32>, vector<8x128xf32> -> vector<8x128xf32>
    %cst_22 = arith.constant 0.000000e+00 : f32
    %57 = vector.broadcast %cst_22 : f32 to vector<8x128xf32>
    %58 = arith.subf %57, %56 : vector<8x128xf32>
    %59 = math.exp %58 : vector<8x128xf32>
    %60 = arith.addf %51, %59 : vector<8x128xf32>
    %61 = vector.extract_strided_slice %15 {offsets = [5, 0], sizes = [1, 128], strides = [1, 1]} : vector<8x128xf32> to vector<1x128xf32>
    %62 = vector.broadcast %61 : vector<1x128xf32> to vector<8x128xf32>
    %63 = arith.subf %9, %62 : vector<8x128xf32>
    %64 = math.absf %63 : vector<8x128xf32>
    %cst_23 = arith.constant dense<0.000000e+00> : vector<8x128xf32>
    %65 = tpu.matmul %64, %10, %cst_23 {dimension_numbers = #tpu.dot_dimension_numbers<[1], [0], [0], [1], [0, 0, 1, 1], [], []>} : vector<8x128xf32>, vector<128x128xf32>, vector<8x128xf32> -> vector<8x128xf32>
    %cst_24 = arith.constant 0.000000e+00 : f32
    %66 = vector.broadcast %cst_24 : f32 to vector<8x128xf32>
    %67 = arith.subf %66, %65 : vector<8x128xf32>
    %68 = math.exp %67 : vector<8x128xf32>
    %69 = arith.addf %60, %68 : vector<8x128xf32>
    %70 = vector.extract_strided_slice %15 {offsets = [6, 0], sizes = [1, 128], strides = [1, 1]} : vector<8x128xf32> to vector<1x128xf32>
    %71 = vector.broadcast %70 : vector<1x128xf32> to vector<8x128xf32>
    %72 = arith.subf %9, %71 : vector<8x128xf32>
    %73 = math.absf %72 : vector<8x128xf32>
    %cst_25 = arith.constant dense<0.000000e+00> : vector<8x128xf32>
    %74 = tpu.matmul %73, %10, %cst_25 {dimension_numbers = #tpu.dot_dimension_numbers<[1], [0], [0], [1], [0, 0, 1, 1], [], []>} : vector<8x128xf32>, vector<128x128xf32>, vector<8x128xf32> -> vector<8x128xf32>
    %cst_26 = arith.constant 0.000000e+00 : f32
    %75 = vector.broadcast %cst_26 : f32 to vector<8x128xf32>
    %76 = arith.subf %75, %74 : vector<8x128xf32>
    %77 = math.exp %76 : vector<8x128xf32>
    %78 = arith.addf %69, %77 : vector<8x128xf32>
    %79 = vector.extract_strided_slice %15 {offsets = [7, 0], sizes = [1, 128], strides = [1, 1]} : vector<8x128xf32> to vector<1x128xf32>
    %80 = vector.broadcast %79 : vector<1x128xf32> to vector<8x128xf32>
    %81 = arith.subf %9, %80 : vector<8x128xf32>
    %82 = math.absf %81 : vector<8x128xf32>
    %cst_27 = arith.constant dense<0.000000e+00> : vector<8x128xf32>
    %83 = tpu.matmul %82, %10, %cst_27 {dimension_numbers = #tpu.dot_dimension_numbers<[1], [0], [0], [1], [0, 0, 1, 1], [], []>} : vector<8x128xf32>, vector<128x128xf32>, vector<8x128xf32> -> vector<8x128xf32>
    %cst_28 = arith.constant 0.000000e+00 : f32
    %84 = vector.broadcast %cst_28 : f32 to vector<8x128xf32>
    %85 = arith.subf %84, %83 : vector<8x128xf32>
    %86 = math.exp %85 : vector<8x128xf32>
    %87 = arith.addf %78, %86 : vector<8x128xf32>
    %c1_i32 = arith.constant 1 : i32
    %cst_29 = arith.constant 1.000000e+00 : f32
    %88 = vector.broadcast %cst_29 : f32 to vector<8x128xf32>
    %89 = arith.subf %87, %88 : vector<8x128xf32>
    %c0_30 = arith.constant 0 : index
    %c0_31 = arith.constant 0 : index
    %90 = vector.load %arg4[%c0_30, %c0_31] : memref<8x128xf32, #tpu.memory_space<vmem>>, vector<8x128xf32>
    tpu.vector_store %arg4[%c0_30, %c0_31], %89 {strides = array<i32>} : memref<8x128xf32, #tpu.memory_space<vmem>>, vector<8x128xf32>,
    return
  }
  func.func @transform_0(%arg0: i32) -> (i32, i32) {
    %c0_i32 = arith.constant 0 : i32
    %c0_i32_0 = arith.constant 0 : i32
    %c0_i32_1 = arith.constant 0 : i32
    return %c0_i32, %c0_i32_0 : i32, i32
  }
  func.func @transform_1(%arg0: i32) -> (i32, i32) {
    %c0_i32 = arith.constant 0 : i32
    %c0_i32_0 = arith.constant 0 : i32
    %c0_i32_1 = arith.constant 0 : i32
    return %c0_i32, %c0_i32_0 : i32, i32
  }
  func.func @transform_2(%arg0: i32) -> (i32, i32) {
    %c0_i32 = arith.constant 0 : i32
    %c0_i32_0 = arith.constant 0 : i32
    %c0_i32_1 = arith.constant 0 : i32
    return %c0_i32, %c0_i32_0 : i32, i32
  }
  func.func @transform_3(%arg0: i32) -> (i32, i32) {
    %c0_i32 = arith.constant 0 : i32
    %c0_i32_0 = arith.constant 0 : i32
    return %arg0, %c0_i32 : i32, i32
  }
}

</mosaic_0001>

<llo_original>
// kernel: tpu_custom_call.1
$region0: #{tpu_custom_call.1}
  #allocation0 [shape = 'u32[]', space=smem, size = 0x4, offset = 0x4, fixed_abs, tag = 'smem constant byte address 0x4 - core index']
  #allocation1 [shape = 'u32[144,128]{1,0:T(1,128)}', space=vmem, size = 0x12000, scoped, tag = 'internal scratch']
  #allocation2 [shape = 'f32[8,128]{1,0:T(8,128)}', space=vmem, size = 0x1000, scoped, tag = 'scratch operand']
  %s0 = inlined_call_operand.hbm [shape: f32[8,32], index: 0, kind: input, shape index: {}]
  %s1 = inlined_call_operand.hbm [shape: f32[32,128], index: 1, kind: input, shape index: {}]
  %s2 = inlined_call_operand.hbm [shape: f32[128,128], index: 2, kind: input, shape index: {}]
  %s3 = inlined_call_operand.hbm [shape: f32[8,128], index: 3, kind: output, shape index: {}]
  %s4 = sld [smem:[#allocation0]]
  $region34: #{tpu_custom_call.1} parent=0
    _
  %s6 = ssub.s32 1, %s4
  %s7 = scalar_select 0, %s6, %s4
  $region1: #{tpu_custom_call.1} parent=0
    #allocation3 [shape = 'u8[4096]{0}', space=vmem, size = 0x1000, scoped, tag = 'input window, operand 0, single buffered']
    #allocation4 [shape = 's32[1]{0}', space=sflag, size = 0x4, scoped, tag = 'scoped memory for tpu_custom_call.1']
    #allocation5 [shape = 's32[1]{0}', space=sflag, size = 0x4, scoped, tag = 'scoped memory for tpu_custom_call.1']
    #allocation6 [shape = 'u8[16384]{0}', space=vmem, size = 0x4000, scoped, tag = 'input window, operand 1, single buffered']
    #allocation7 [shape = 's32[1]{0}', space=sflag, size = 0x4, scoped, tag = 'scoped memory for tpu_custom_call.1']
    #allocation8 [shape = 'u8[65536]{0}', space=vmem, size = 0x10000, scoped, tag = 'input window, operand 2, single buffered']
    #allocation9 [shape = 'u8[4096]{0}', space=vmem, size = 0x1000, scoped, tag = 'output window, operand 0, single buffered']
    %8 = vsyncpa [#allocation4], 0
    %9 = vsyncpa [#allocation7], 0
    %10 = vsyncpa [#allocation5], 0
    // Predicated region
    $region2: #{tpu_custom_call.1} parent=1 // pred_check
      _
    $region3: #{tpu_custom_call.1} parent=1 // pred_check_branch
      %12 = sbr.rel (0) target = $region5
    $region4: #{tpu_custom_call.1} parent=1 // pred_region
      %s14 = ssub.s32 128, 128
      %15 = vsyncadd [#allocation4], %s14
      %s17 = sshll.u32 [#allocation3], 4
      %s18 = int_to_ptr.vmem [resolvable:$true] %s17
      %20 = dma.hbm_to_vmem [thread:$0]  %s0, 128, %s18, [#allocation4]
    $region5: #{tpu_custom_call.1} parent=1 // pred_fallthru
      _
    // Predicated region
    $region6: #{tpu_custom_call.1} parent=1 // pred_check
      _
    $region7: #{tpu_custom_call.1} parent=1 // pred_check_branch
      %22 = sbr.rel (0) target = $region9
    $region8: #{tpu_custom_call.1} parent=1 // pred_region
      %s24 = ssub.s32 512, 512
      %25 = vsyncadd [#allocation7], %s24
      %s26 = sshll.u32 [#allocation6], 4
      %s27 = int_to_ptr.vmem [resolvable:$true] %s26
      %32 = dma.hbm_to_vmem [thread:$0]  %s1, 512, %s27, [#allocation7], 128, 128, 8
    $region9: #{tpu_custom_call.1} parent=1 // pred_fallthru
      _
    // Predicated region
    $region10: #{tpu_custom_call.1} parent=1 // pred_check
      _
    $region11: #{tpu_custom_call.1} parent=1 // pred_check_branch
      %34 = sbr.rel (0) target = $region13
    $region12: #{tpu_custom_call.1} parent=1 // pred_region
      %s36 = ssub.s32 2048, 2048
      %37 = vsyncadd [#allocation7], %s36
      %s38 = sshll.u32 [#allocation8], 4
      %s39 = int_to_ptr.vmem [resolvable:$true] %s38
      %44 = dma.hbm_to_vmem [thread:$0]  %s2, 2048, %s39, [#allocation7], 128, 128, 8
    $region13: #{tpu_custom_call.1} parent=1 // pred_fallthru
      _
    // Predicated region
    $region14: #{tpu_custom_call.1} parent=1 // pred_check
      _
    $region15: #{tpu_custom_call.1} parent=1 // pred_check_branch
      %46 = sbr.rel (0) target = $region17
    $region16: #{tpu_custom_call.1} parent=1 // pred_region
      %47 = dma.done [#allocation4], 128
    $region17: #{tpu_custom_call.1} parent=1 // pred_fallthru
      _
    // Predicated region
    $region18: #{tpu_custom_call.1} parent=1 // pred_check
      _
    $region19: #{tpu_custom_call.1} parent=1 // pred_check_branch
      %49 = sbr.rel (0) target = $region21
    $region20: #{tpu_custom_call.1} parent=1 // pred_region
      %50 = dma.done [#allocation7], 512
    $region21: #{tpu_custom_call.1} parent=1 // pred_fallthru
      _
    // Predicated region
    $region22: #{tpu_custom_call.1} parent=1 // pred_check
      _
    $region23: #{tpu_custom_call.1} parent=1 // pred_check_branch
      %52 = sbr.rel (0) target = $region25
    $region24: #{tpu_custom_call.1} parent=1 // pred_region
      %53 = dma.done [#allocation7], 2048
    $region25: #{tpu_custom_call.1} parent=1 // pred_fallthru
      _
    %v54 = vld [vmem:[#allocation3] sm:$0xff]
    %v55 = vld [vmem:[#allocation6] sm:$0xff]
    %v56 = vld [vmem:[#allocation6 + $0x8] sm:$0xff]
    %v57 = vld [vmem:[#allocation6 + $0x10] sm:$0xff]
    %v58 = vld [vmem:[#allocation6 + $0x18] sm:$0xff]
    %vm59 = vcmask 261120
    %v61 = vsel %vm59, %v54, 0
    %63 = vmatprep.subr.mxu0 0.0
    %64 = vmatpush1.msra.mxu0 %v55
    %65 = vmatprep.subr.mxu0 0.0
    %66 = vmatpush1.msra.mxu0 %v56
    %67 = vmatprep.subr.mxu0 0.0
    %68 = vmatpush1.msra.mxu0 %v57
    %69 = vmatprep.subr.mxu0 0.0
    %70 = vmatpush1.msra.mxu0 %v58
    %71 = vmatprep.subr.mxu0 0.0
    %72 = vmatpush1.msra.mxu0 0.0
    %73 = vmatprep.subr.mxu0 0.0
    %74 = vmatpush1.msra.mxu0 0.0
    %75 = vmatprep.subr.mxu0 0.0
    %76 = vmatpush1.msra.mxu0 0.0
    %77 = vmatprep.subr.mxu0 0.0
    %78 = vmatpush1.msra.mxu0 0.0
    %79 = vmatprep.subr.mxu0 0.0
    %80 = vmatpush1.msra.mxu0 0.0
    %81 = vmatprep.subr.mxu0 0.0
    %82 = vmatpush1.msra.mxu0 0.0
    %83 = vmatprep.subr.mxu0 0.0
    %84 = vmatpush1.msra.mxu0 0.0
    %85 = vmatprep.subr.mxu0 0.0
    %86 = vmatpush1.msra.mxu0 0.0
    %87 = vmatprep.subr.mxu0 0.0
    %88 = vmatpush1.msra.mxu0 0.0
    %89 = vmatprep.subr.mxu0 0.0
    %90 = vmatpush1.msra.mxu0 0.0
    %91 = vmatprep.subr.mxu0 0.0
    %92 = vmatpush1.msra.mxu0 0.0
    %93 = vmatprep.subr.mxu0 0.0
    %94 = vmatpush1.msra.mxu0 0.0
    %95 = vmatprep.subr.mxu0 0.0
    %96 = vmatpush1.msra.mxu0 0.0
    %97 = vmatprep.subr.mxu0 0.0
    %98 = vmatpush1.msra.mxu0 0.0
    %99 = vmatprep.subr.mxu0 0.0
    %100 = vmatpush1.msra.mxu0 0.0
    %101 = vmatprep.subr.mxu0 0.0
    %102 = vmatpush1.msra.mxu0 0.0
    %103 = vmatprep.subr.mxu0 0.0
    %104 = vmatpush1.msra.mxu0 0.0
    %105 = vmatprep.subr.mxu0 0.0
    %106 = vmatpush1.msra.mxu0 0.0
    %107 = vmatprep.subr.mxu0 0.0
    %108 = vmatpush1.msra.mxu0 0.0
    %109 = vmatprep.subr.mxu0 0.0
    %110 = vmatpush1.msra.mxu0 0.0
    %111 = vmatprep.subr.mxu0 0.0
    %112 = vmatpush1.msra.mxu0 0.0
    %113 = vmatprep.subr.mxu0 0.0
    %114 = vmatpush1.msra.mxu0 0.0
    %115 = vmatprep.subr.mxu0 0.0
    %116 = vmatpush1.msra.mxu0 0.0
    %117 = vmatprep.subr.mxu0 0.0
    %118 = vmatpush1.msra.mxu0 0.0
    %119 = vmatprep.subr.mxu0 0.0
    %120 = vmatpush1.msra.mxu0 0.0
    %121 = vmatprep.subr.mxu0 0.0
    %122 = vmatpush1.msra.mxu0 0.0
    %123 = vmatprep.subr.mxu0 0.0
    %124 = vmatpush1.msra.mxu0 0.0
    %125 = vmatprep.subr.mxu0 0.0
    %126 = vmatpush1.msra.mxu0 0.0
    %127 = vmatprep.mubr.f32.mxu0 0.0
    %128 = vmatmul.mubr.f32.gmra.mrb[0].mxu0 %v61
    %v129 = vpop.f32.mrb[0].mxu0
    %v130 = vadd.f32 0.0, %v129
    %v131 = vpop.f32.mrb[0].mxu0
    %132 = vdwg.mxu0
    %133 = vst [vmem:[#allocation2] sm:$0xff] %v130
    %134 = vst [vmem:[#allocation2 + $0x4] sm:$0xf] 1e+30
    %s135 = smul.u32 0, 8
    %s136 = scalar_lea.vmem [#allocation2], %s135
    %v137 = vld [vmem:[%s136] sm:$0xff]
    %v138 = vld [vmem:[#allocation8] sm:$0xff]
    %v139 = vld [vmem:[#allocation8 + $0x8] sm:$0xff]
    %v140 = vld [vmem:[#allocation8 + $0x10] sm:$0xff]
    %v141 = vld [vmem:[#allocation8 + $0x18] sm:$0xff]
    %v142 = vld [vmem:[#allocation8 + $0x20] sm:$0xff]
    %v143 = vld [vmem:[#allocation8 + $0x28] sm:$0xff]
    %v144 = vld [vmem:[#allocation8 + $0x30] sm:$0xff]
    %v145 = vld [vmem:[#allocation8 + $0x38] sm:$0xff]
    %v146 = vld [vmem:[#allocation8 + $0x40] sm:$0xff]
    %v147 = vld [vmem:[#allocation8 + $0x48] sm:$0xff]
    %v148 = vld [vmem:[#allocation8 + $0x50] sm:$0xff]
    %v149 = vld [vmem:[#allocation8 + $0x58] sm:$0xff]
    %v150 = vld [vmem:[#allocation8 + $0x60] sm:$0xff]
    %v151 = vld [vmem:[#allocation8 + $0x68] sm:$0xff]
    %v152 = vld [vmem:[#allocation8 + $0x70] sm:$0xff]
    %v153 = vld [vmem:[#allocation8 + $0x78] sm:$0xff]
    %v154 = vld [vmem:[#allocation2] sm:$0xff]
    %v155 = vlaneseq
    %v156 = vshrl.u32 %v155, 7
    %v157 = vsub.s32 0, %v156
    %v158 = vrot.slane %v154, %v157
    %v159 = vsub.f32 %v137, %v158
    %v160 = vand.u32 2147483647, %v159
    %161 = vmatprep.subr.mxu0 0.0
    %162 = vmatpush1.msra.mxu0 %v138
    %163 = vmatprep.subr.mxu0 0.0
    %164 = vmatpush1.msra.mxu0 %v139
    %165 = vmatprep.subr.mxu0 0.0
    %166 = vmatpush1.msra.mxu0 %v140
    %167 = vmatprep.subr.mxu0 0.0
    %168 = vmatpush1.msra.mxu0 %v141
    %169 = vmatprep.subr.mxu0 0.0
    %170 = vmatpush1.msra.mxu0 %v142
    %171 = vmatprep.subr.mxu0 0.0
    %172 = vmatpush1.msra.mxu0 %v143
    %173 = vmatprep.subr.mxu0 0.0
    %174 = vmatpush1.msra.mxu0 %v144
    %175 = vmatprep.subr.mxu0 0.0
    %176 = vmatpush1.msra.mxu0 %v145
    %177 = vmatprep.subr.mxu0 0.0
    %178 = vmatpush1.msra.mxu0 %v146
    %179 = vmatprep.subr.mxu0 0.0
    %180 = vmatpush1.msra.mxu0 %v147
    %181 = vmatprep.subr.mxu0 0.0
    %182 = vmatpush1.msra.mxu0 %v148
    %183 = vmatprep.subr.mxu0 0.0
    %184 = vmatpush1.msra.mxu0 %v149
    %185 = vmatprep.subr.mxu0 0.0
    %186 = vmatpush1.msra.mxu0 %v150
    %187 = vmatprep.subr.mxu0 0.0
    %188 = vmatpush1.msra.mxu0 %v151
    %189 = vmatprep.subr.mxu0 0.0
    %190 = vmatpush1.msra.mxu0 %v152
    %191 = vmatprep.subr.mxu0 0.0
    %192 = vmatpush1.msra.mxu0 %v153
    %193 = vmatprep.subr.mxu0 0.0
    %194 = vmatpush1.msra.mxu0 0.0
    %195 = vmatprep.subr.mxu0 0.0
    %196 = vmatpush1.msra.mxu0 0.0
    %197 = vmatprep.subr.mxu0 0.0
    %198 = vmatpush1.msra.mxu0 0.0
    %199 = vmatprep.subr.mxu0 0.0
    %200 = vmatpush1.msra.mxu0 0.0
    %201 = vmatprep.subr.mxu0 0.0
    %202 = vmatpush1.msra.mxu0 0.0
    %203 = vmatprep.subr.mxu0 0.0
    %204 = vmatpush1.msra.mxu0 0.0
    %205 = vmatprep.subr.mxu0 0.0
    %206 = vmatpush1.msra.mxu0 0.0
    %207 = vmatprep.subr.mxu0 0.0
    %208 = vmatpush1.msra.mxu0 0.0
    %209 = vmatprep.subr.mxu0 0.0
    %210 = vmatpush1.msra.mxu0 0.0
    %211 = vmatprep.subr.mxu0 0.0
    %212 = vmatpush1.msra.mxu0 0.0
    %213 = vmatprep.subr.mxu0 0.0
    %214 = vmatpush1.msra.mxu0 0.0
    %215 = vmatprep.subr.mxu0 0.0
    %216 = vmatpush1.msra.mxu0 0.0
    %217 = vmatprep.subr.mxu0 0.0
    %218 = vmatpush1.msra.mxu0 0.0
    %219 = vmatprep.subr.mxu0 0.0
    %220 = vmatpush1.msra.mxu0 0.0
    %221 = vmatprep.subr.mxu0 0.0
    %222 = vmatpush1.msra.mxu0 0.0
    %223 = vmatprep.subr.mxu0 0.0
    %224 = vmatpush1.msra.mxu0 0.0
    %225 = vmatprep.mubr.f32.mxu0 0.0
    %226 = vmatmul.mubr.f32.gmra.mrb[0].mxu0 %v160
    %v227 = vpop.f32.mrb[0].mxu0
    %v228 = vadd.f32 0.0, %v227
    %v229 = vpop.f32.mrb[0].mxu0
    %230 = vdwg.mxu0
    %v231 = vsub.f32 0.0, %v228
    %v232 = vmul.f32 %v231, 1.442695
    %v233 = vpow.pop %v232
    %v234 = vadd.f32 %v233, 0.0
    %v235 = vlaneseq
    %v236 = vshrl.u32 %v235, 7
    %v237 = vsub.s32 1, %v236
    %v238 = vrot.slane %v154, %v237
    %v239 = vsub.f32 %v137, %v238
    %v240 = vand.u32 2147483647, %v239
    %241 = vmatprep.subr.mxu0 0.0
    %242 = vmatpush1.msra.mxu0 %v138
    %243 = vmatprep.subr.mxu0 0.0
    %244 = vmatpush1.msra.mxu0 %v139
    %245 = vmatprep.subr.mxu0 0.0
    %246 = vmatpush1.msra.mxu0 %v140
    %247 = vmatprep.subr.mxu0 0.0
    %248 = vmatpush1.msra.mxu0 %v141
    %249 = vmatprep.subr.mxu0 0.0
    %250 = vmatpush1.msra.mxu0 %v142
    %251 = vmatprep.subr.mxu0 0.0
    %252 = vmatpush1.msra.mxu0 %v143
    %253 = vmatprep.subr.mxu0 0.0
    %254 = vmatpush1.msra.mxu0 %v144
    %255 = vmatprep.subr.mxu0 0.0
    %256 = vmatpush1.msra.mxu0 %v145
    %257 = vmatprep.subr.mxu0 0.0
    %258 = vmatpush1.msra.mxu0 %v146
    %259 = vmatprep.subr.mxu0 0.0
    %260 = vmatpush1.msra.mxu0 %v147
    %261 = vmatprep.subr.mxu0 0.0
    %262 = vmatpush1.msra.mxu0 %v148
    %263 = vmatprep.subr.mxu0 0.0
    %264 = vmatpush1.msra.mxu0 %v149
    %265 = vmatprep.subr.mxu0 0.0
    %266 = vmatpush1.msra.mxu0 %v150
    %267 = vmatprep.subr.mxu0 0.0
    %268 = vmatpush1.msra.mxu0 %v151
    %269 = vmatprep.subr.mxu0 0.0
    %270 = vmatpush1.msra.mxu0 %v152
    %271 = vmatprep.subr.mxu0 0.0
    %272 = vmatpush1.msra.mxu0 %v153
    %273 = vmatprep.subr.mxu0 0.0
    %274 = vmatpush1.msra.mxu0 0.0
    %275 = vmatprep.subr.mxu0 0.0
    %276 = vmatpush1.msra.mxu0 0.0
    %277 = vmatprep.subr.mxu0 0.0
    %278 = vmatpush1.msra.mxu0 0.0
    %279 = vmatprep.subr.mxu0 0.0
    %280 = vmatpush1.msra.mxu0 0.0
    %281 = vmatprep.subr.mxu0 0.0
    %282 = vmatpush1.msra.mxu0 0.0
    %283 = vmatprep.subr.mxu0 0.0
    %284 = vmatpush1.msra.mxu0 0.0
    %285 = vmatprep.subr.mxu0 0.0
    %286 = vmatpush1.msra.mxu0 0.0
    %287 = vmatprep.subr.mxu0 0.0
    %288 = vmatpush1.msra.mxu0 0.0
    %289 = vmatprep.subr.mxu0 0.0
    %290 = vmatpush1.msra.mxu0 0.0
    %291 = vmatprep.subr.mxu0 0.0
    %292 = vmatpush1.msra.mxu0 0.0
    %293 = vmatprep.subr.mxu0 0.0
    %294 = vmatpush1.msra.mxu0 0.0
    %295 = vmatprep.subr.mxu0 0.0
    %296 = vmatpush1.msra.mxu0 0.0
    %297 = vmatprep.subr.mxu0 0.0
    %298 = vmatpush1.msra.mxu0 0.0
    %299 = vmatprep.subr.mxu0 0.0
    %300 = vmatpush1.msra.mxu0 0.0
    %301 = vmatprep.subr.mxu0 0.0
    %302 = vmatpush1.msra.mxu0 0.0
    %303 = vmatprep.subr.mxu0 0.0
    %304 = vmatpush1.msra.mxu0 0.0
    %305 = vmatprep.mubr.f32.mxu0 0.0
    %306 = vmatmul.mubr.f32.gmra.mrb[0].mxu0 %v240
    %v307 = vpop.f32.mrb[0].mxu0
    %v308 = vadd.f32 0.0, %v307
    %v309 = vpop.f32.mrb[0].mxu0
    %310 = vdwg.mxu0
    %v311 = vsub.f32 0.0, %v308
    %v312 = vmul.f32 %v311, 1.442695
    %v313 = vpow.pop %v312
    %v314 = vadd.f32 %v234, %v313
    %v315 = vlaneseq
    %v316 = vshrl.u32 %v315, 7
    %v317 = vsub.s32 2, %v316
    %v318 = vrot.slane %v154, %v317
    %v319 = vsub.f32 %v137, %v318
    %v320 = vand.u32 2147483647, %v319
    %321 = vmatprep.subr.mxu0 0.0
    %322 = vmatpush1.msra.mxu0 %v138
    %323 = vmatprep.subr.mxu0 0.0
    %324 = vmatpush1.msra.mxu0 %v139
    %325 = vmatprep.subr.mxu0 0.0
    %326 = vmatpush1.msra.mxu0 %v140
    %327 = vmatprep.subr.mxu0 0.0
    %328 = vmatpush1.msra.mxu0 %v141
    %329 = vmatprep.subr.mxu0 0.0
    %330 = vmatpush1.msra.mxu0 %v142
    %331 = vmatprep.subr.mxu0 0.0
    %332 = vmatpush1.msra.mxu0 %v143
    %333 = vmatprep.subr.mxu0 0.0
    %334 = vmatpush1.msra.mxu0 %v144
    %335 = vmatprep.subr.mxu0 0.0
    %336 = vmatpush1.msra.mxu0 %v145
    %337 = vmatprep.subr.mxu0 0.0
    %338 = vmatpush1.msra.mxu0 %v146
    %339 = vmatprep.subr.mxu0 0.0
    %340 = vmatpush1.msra.mxu0 %v147
    %341 = vmatprep.subr.mxu0 0.0
    %342 = vmatpush1.msra.mxu0 %v148
    %343 = vmatprep.subr.mxu0 0.0
    %344 = vmatpush1.msra.mxu0 %v149
    %345 = vmatprep.subr.mxu0 0.0
    %346 = vmatpush1.msra.mxu0 %v150
    %347 = vmatprep.subr.mxu0 0.0
    %348 = vmatpush1.msra.mxu0 %v151
    %349 = vmatprep.subr.mxu0 0.0
    %350 = vmatpush1.msra.mxu0 %v152
    %351 = vmatprep.subr.mxu0 0.0
    %352 = vmatpush1.msra.mxu0 %v153
    %353 = vmatprep.subr.mxu0 0.0
    %354 = vmatpush1.msra.mxu0 0.0
    %355 = vmatprep.subr.mxu0 0.0
    %356 = vmatpush1.msra.mxu0 0.0
    %357 = vmatprep.subr.mxu0 0.0
    %358 = vmatpush1.msra.mxu0 0.0
    %359 = vmatprep.subr.mxu0 0.0
    %360 = vmatpush1.msra.mxu0 0.0
    %361 = vmatprep.subr.mxu0 0.0
    %362 = vmatpush1.msra.mxu0 0.0
    %363 = vmatprep.subr.mxu0 0.0
    %364 = vmatpush1.msra.mxu0 0.0
    %365 = vmatprep.subr.mxu0 0.0
    %366 = vmatpush1.msra.mxu0 0.0
    %367 = vmatprep.subr.mxu0 0.0
    %368 = vmatpush1.msra.mxu0 0.0
    %369 = vmatprep.subr.mxu0 0.0
    %370 = vmatpush1.msra.mxu0 0.0
    %371 = vmatprep.subr.mxu0 0.0
    %372 = vmatpush1.msra.mxu0 0.0
    %373 = vmatprep.subr.mxu0 0.0
    %374 = vmatpush1.msra.mxu0 0.0
    %375 = vmatprep.subr.mxu0 0.0
    %376 = vmatpush1.msra.mxu0 0.0
    %377 = vmatprep.subr.mxu0 0.0
    %378 = vmatpush1.msra.mxu0 0.0
    %379 = vmatprep.subr.mxu0 0.0
    %380 = vmatpush1.msra.mxu0 0.0
    %381 = vmatprep.subr.mxu0 0.0
    %382 = vmatpush1.msra.mxu0 0.0
    %383 = vmatprep.subr.mxu0 0.0
    %384 = vmatpush1.msra.mxu0 0.0
    %385 = vmatprep.mubr.f32.mxu0 0.0
    %386 = vmatmul.mubr.f32.gmra.mrb[0].mxu0 %v320
    %v387 = vpop.f32.mrb[0].mxu0
    %v388 = vadd.f32 0.0, %v387
    %v389 = vpop.f32.mrb[0].mxu0
    %390 = vdwg.mxu0
    %v391 = vsub.f32 0.0, %v388
    %v392 = vmul.f32 %v391, 1.442695
    %v393 = vpow.pop %v392
    %v394 = vadd.f32 %v314, %v393
    %v395 = vlaneseq
    %v396 = vshrl.u32 %v395, 7
    %v397 = vsub.s32 3, %v396
    %v398 = vrot.slane %v154, %v397
    %v399 = vsub.f32 %v137, %v398
    %v400 = vand.u32 2147483647, %v399
    %401 = vmatprep.subr.mxu0 0.0
    %402 = vmatpush1.msra.mxu0 %v138
    %403 = vmatprep.subr.mxu0 0.0
    %404 = vmatpush1.msra.mxu0 %v139
    %405 = vmatprep.subr.mxu0 0.0
    %406 = vmatpush1.msra.mxu0 %v140
    %407 = vmatprep.subr.mxu0 0.0
    %408 = vmatpush1.msra.mxu0 %v141
    %409 = vmatprep.subr.mxu0 0.0
    %410 = vmatpush1.msra.mxu0 %v142
    %411 = vmatprep.subr.mxu0 0.0
    %412 = vmatpush1.msra.mxu0 %v143
    %413 = vmatprep.subr.mxu0 0.0
    %414 = vmatpush1.msra.mxu0 %v144
    %415 = vmatprep.subr.mxu0 0.0
    %416 = vmatpush1.msra.mxu0 %v145
    %417 = vmatprep.subr.mxu0 0.0
    %418 = vmatpush1.msra.mxu0 %v146
    %419 = vmatprep.subr.mxu0 0.0
    %420 = vmatpush1.msra.mxu0 %v147
    %421 = vmatprep.subr.mxu0 0.0
    %422 = vmatpush1.msra.mxu0 %v148
    %423 = vmatprep.subr.mxu0 0.0
    %424 = vmatpush1.msra.mxu0 %v149
    %425 = vmatprep.subr.mxu0 0.0
    %426 = vmatpush1.msra.mxu0 %v150
    %427 = vmatprep.subr.mxu0 0.0
    %428 = vmatpush1.msra.mxu0 %v151
    %429 = vmatprep.subr.mxu0 0.0
    %430 = vmatpush1.msra.mxu0 %v152
    %431 = vmatprep.subr.mxu0 0.0
    %432 = vmatpush1.msra.mxu0 %v153
    %433 = vmatprep.subr.mxu0 0.0
    %434 = vmatpush1.msra.mxu0 0.0
    %435 = vmatprep.subr.mxu0 0.0
    %436 = vmatpush1.msra.mxu0 0.0
    %437 = vmatprep.subr.mxu0 0.0
    %438 = vmatpush1.msra.mxu0 0.0
    %439 = vmatprep.subr.mxu0 0.0
    %440 = vmatpush1.msra.mxu0 0.0
    %441 = vmatprep.subr.mxu0 0.0
    %442 = vmatpush1.msra.mxu0 0.0
    %443 = vmatprep.subr.mxu0 0.0
    %444 = vmatpush1.msra.mxu0 0.0
    %445 = vmatprep.subr.mxu0 0.0
    %446 = vmatpush1.msra.mxu0 0.0
    %447 = vmatprep.subr.mxu0 0.0
    %448 = vmatpush1.msra.mxu0 0.0
    %449 = vmatprep.subr.mxu0 0.0
    %450 = vmatpush1.msra.mxu0 0.0
    %451 = vmatprep.subr.mxu0 0.0
    %452 = vmatpush1.msra.mxu0 0.0
    %453 = vmatprep.subr.mxu0 0.0
    %454 = vmatpush1.msra.mxu0 0.0
    %455 = vmatprep.subr.mxu0 0.0
    %456 = vmatpush1.msra.mxu0 0.0
    %457 = vmatprep.subr.mxu0 0.0
    %458 = vmatpush1.msra.mxu0 0.0
    %459 = vmatprep.subr.mxu0 0.0
    %460 = vmatpush1.msra.mxu0 0.0
    %461 = vmatprep.subr.mxu0 0.0
    %462 = vmatpush1.msra.mxu0 0.0
    %463 = vmatprep.subr.mxu0 0.0
    %464 = vmatpush1.msra.mxu0 0.0
    %465 = vmatprep.mubr.f32.mxu0 0.0
    %466 = vmatmul.mubr.f32.gmra.mrb[0].mxu0 %v400
    %v467 = vpop.f32.mrb[0].mxu0
    %v468 = vadd.f32 0.0, %v467
    %v469 = vpop.f32.mrb[0].mxu0
    %470 = vdwg.mxu0
    %v471 = vsub.f32 0.0, %v468
    %v472 = vmul.f32 %v471, 1.442695
    %v473 = vpow.pop %v472
    %v474 = vadd.f32 %v394, %v473
    %v475 = vlaneseq
    %v476 = vshrl.u32 %v475, 7
    %v477 = vsub.s32 4, %v476
    %v478 = vrot.slane %v154, %v477
    %v479 = vsub.f32 %v137, %v478
    %v480 = vand.u32 2147483647, %v479
    %481 = vmatprep.subr.mxu0 0.0
    %482 = vmatpush1.msra.mxu0 %v138
    %483 = vmatprep.subr.mxu0 0.0
    %484 = vmatpush1.msra.mxu0 %v139
    %485 = vmatprep.subr.mxu0 0.0
    %486 = vmatpush1.msra.mxu0 %v140
    %487 = vmatprep.subr.mxu0 0.0
    %488 = vmatpush1.msra.mxu0 %v141
    %489 = vmatprep.subr.mxu0 0.0
    %490 = vmatpush1.msra.mxu0 %v142
    %491 = vmatprep.subr.mxu0 0.0
    %492 = vmatpush1.msra.mxu0 %v143
    %493 = vmatprep.subr.mxu0 0.0
    %494 = vmatpush1.msra.mxu0 %v144
    %495 = vmatprep.subr.mxu0 0.0
    %496 = vmatpush1.msra.mxu0 %v145
    %497 = vmatprep.subr.mxu0 0.0
    %498 = vmatpush1.msra.mxu0 %v146
    %499 = vmatprep.subr.mxu0 0.0
    %500 = vmatpush1.msra.mxu0 %v147
    %501 = vmatprep.subr.mxu0 0.0
    %502 = vmatpush1.msra.mxu0 %v148
    %503 = vmatprep.subr.mxu0 0.0
    %504 = vmatpush1.msra.mxu0 %v149
    %505 = vmatprep.subr.mxu0 0.0
    %506 = vmatpush1.msra.mxu0 %v150
    %507 = vmatprep.subr.mxu0 0.0
    %508 = vmatpush1.msra.mxu0 %v151
    %509 = vmatprep.subr.mxu0 0.0
    %510 = vmatpush1.msra.mxu0 %v152
    %511 = vmatprep.subr.mxu0 0.0
    %512 = vmatpush1.msra.mxu0 %v153
    %513 = vmatprep.subr.mxu0 0.0
    %514 = vmatpush1.msra.mxu0 0.0
    %515 = vmatprep.subr.mxu0 0.0
    %516 = vmatpush1.msra.mxu0 0.0
    %517 = vmatprep.subr.mxu0 0.0
    %518 = vmatpush1.msra.mxu0 0.0
    %519 = vmatprep.subr.mxu0 0.0
    %520 = vmatpush1.msra.mxu0 0.0
    %521 = vmatprep.subr.mxu0 0.0
    %522 = vmatpush1.msra.mxu0 0.0
    %523 = vmatprep.subr.mxu0 0.0
    %524 = vmatpush1.msra.mxu0 0.0
    %525 = vmatprep.subr.mxu0 0.0
    %526 = vmatpush1.msra.mxu0 0.0
    %527 = vmatprep.subr.mxu0 0.0
    %528 = vmatpush1.msra.mxu0 0.0
    %529 = vmatprep.subr.mxu0 0.0
    %530 = vmatpush1.msra.mxu0 0.0
    %531 = vmatprep.subr.mxu0 0.0
    %532 = vmatpush1.msra.mxu0 0.0
    %533 = vmatprep.subr.mxu0 0.0
    %534 = vmatpush1.msra.mxu0 0.0
    %535 = vmatprep.subr.mxu0 0.0
    %536 = vmatpush1.msra.mxu0 0.0
    %537 = vmatprep.subr.mxu0 0.0
    %538 = vmatpush1.msra.mxu0 0.0
    %539 = vmatprep.subr.mxu0 0.0
    %540 = vmatpush1.msra.mxu0 0.0
    %541 = vmatprep.subr.mxu0 0.0
    %542 = vmatpush1.msra.mxu0 0.0
    %543 = vmatprep.subr.mxu0 0.0
    %544 = vmatpush1.msra.mxu0 0.0
    %545 = vmatprep.mubr.f32.mxu0 0.0
    %546 = vmatmul.mubr.f32.gmra.mrb[0].mxu0 %v480
    %v547 = vpop.f32.mrb[0].mxu0
    %v548 = vadd.f32 0.0, %v547
    %v549 = vpop.f32.mrb[0].mxu0
    %550 = vdwg.mxu0
    %v551 = vsub.f32 0.0, %v548
    %v552 = vmul.f32 %v551, 1.442695
    %v553 = vpow.pop %v552
    %v554 = vadd.f32 %v474, %v553
    %v555 = vlaneseq
    %v556 = vshrl.u32 %v555, 7
    %v557 = vsub.s32 5, %v556
    %v558 = vrot.slane %v154, %v557
    %v559 = vsub.f32 %v137, %v558
    %v560 = vand.u32 2147483647, %v559
    %561 = vmatprep.subr.mxu0 0.0
    %562 = vmatpush1.msra.mxu0 %v138
    %563 = vmatprep.subr.mxu0 0.0
    %564 = vmatpush1.msra.mxu0 %v139
    %565 = vmatprep.subr.mxu0 0.0
    %566 = vmatpush1.msra.mxu0 %v140
    %567 = vmatprep.subr.mxu0 0.0
    %568 = vmatpush1.msra.mxu0 %v141
    %569 = vmatprep.subr.mxu0 0.0
    %570 = vmatpush1.msra.mxu0 %v142
    %571 = vmatprep.subr.mxu0 0.0
    %572 = vmatpush1.msra.mxu0 %v143
    %573 = vmatprep.subr.mxu0 0.0
    %574 = vmatpush1.msra.mxu0 %v144
    %575 = vmatprep.subr.mxu0 0.0
    %576 = vmatpush1.msra.mxu0 %v145
    %577 = vmatprep.subr.mxu0 0.0
    %578 = vmatpush1.msra.mxu0 %v146
    %579 = vmatprep.subr.mxu0 0.0
    %580 = vmatpush1.msra.mxu0 %v147
    %581 = vmatprep.subr.mxu0 0.0
    %582 = vmatpush1.msra.mxu0 %v148
    %583 = vmatprep.subr.mxu0 0.0
    %584 = vmatpush1.msra.mxu0 %v149
    %585 = vmatprep.subr.mxu0 0.0
    %586 = vmatpush1.msra.mxu0 %v150
    %587 = vmatprep.subr.mxu0 0.0
    %588 = vmatpush1.msra.mxu0 %v151
    %589 = vmatprep.subr.mxu0 0.0
    %590 = vmatpush1.msra.mxu0 %v152
    %591 = vmatprep.subr.mxu0 0.0
    %592 = vmatpush1.msra.mxu0 %v153
    %593 = vmatprep.subr.mxu0 0.0
    %594 = vmatpush1.msra.mxu0 0.0
    %595 = vmatprep.subr.mxu0 0.0
    %596 = vmatpush1.msra.mxu0 0.0
    %597 = vmatprep.subr.mxu0 0.0
    %598 = vmatpush1.msra.mxu0 0.0
    %599 = vmatprep.subr.mxu0 0.0
    %600 = vmatpush1.msra.mxu0 0.0
    %601 = vmatprep.subr.mxu0 0.0
    %602 = vmatpush1.msra.mxu0 0.0
    %603 = vmatprep.subr.mxu0 0.0
    %604 = vmatpush1.msra.mxu0 0.0
    %605 = vmatprep.subr.mxu0 0.0
    %606 = vmatpush1.msra.mxu0 0.0
    %607 = vmatprep.subr.mxu0 0.0
    %608 = vmatpush1.msra.mxu0 0.0
    %609 = vmatprep.subr.mxu0 0.0
    %610 = vmatpush1.msra.mxu0 0.0
    %611 = vmatprep.subr.mxu0 0.0
    %612 = vmatpush1.msra.mxu0 0.0
    %613 = vmatprep.subr.mxu0 0.0
    %614 = vmatpush1.msra.mxu0 0.0
    %615 = vmatprep.subr.mxu0 0.0
    %616 = vmatpush1.msra.mxu0 0.0
    %617 = vmatprep.subr.mxu0 0.0
    %618 = vmatpush1.msra.mxu0 0.0
    %619 = vmatprep.subr.mxu0 0.0
    %620 = vmatpush1.msra.mxu0 0.0
    %621 = vmatprep.subr.mxu0 0.0
    %622 = vmatpush1.msra.mxu0 0.0
    %623 = vmatprep.subr.mxu0 0.0
    %624 = vmatpush1.msra.mxu0 0.0
    %625 = vmatprep.mubr.f32.mxu0 0.0
    %626 = vmatmul.mubr.f32.gmra.mrb[0].mxu0 %v560
    %v627 = vpop.f32.mrb[0].mxu0
    %v628 = vadd.f32 0.0, %v627
    %v629 = vpop.f32.mrb[0].mxu0
    %630 = vdwg.mxu0
    %v631 = vsub.f32 0.0, %v628
    %v632 = vmul.f32 %v631, 1.442695
    %v633 = vpow.pop %v632
    %v634 = vadd.f32 %v554, %v633
    %v635 = vlaneseq
    %v636 = vshrl.u32 %v635, 7
    %v637 = vsub.s32 6, %v636
    %v638 = vrot.slane %v154, %v637
    %v639 = vsub.f32 %v137, %v638
    %v640 = vand.u32 2147483647, %v639
    %641 = vmatprep.subr.mxu0 0.0
    %642 = vmatpush1.msra.mxu0 %v138
    %643 = vmatprep.subr.mxu0 0.0
    %644 = vmatpush1.msra.mxu0 %v139
    %645 = vmatprep.subr.mxu0 0.0
    %646 = vmatpush1.msra.mxu0 %v140
    %647 = vmatprep.subr.mxu0 0.0
    %648 = vmatpush1.msra.mxu0 %v141
    %649 = vmatprep.subr.mxu0 0.0
    %650 = vmatpush1.msra.mxu0 %v142
    %651 = vmatprep.subr.mxu0 0.0
    %652 = vmatpush1.msra.mxu0 %v143
    %653 = vmatprep.subr.mxu0 0.0
    %654 = vmatpush1.msra.mxu0 %v144
    %655 = vmatprep.subr.mxu0 0.0
    %656 = vmatpush1.msra.mxu0 %v145
    %657 = vmatprep.subr.mxu0 0.0
    %658 = vmatpush1.msra.mxu0 %v146
    %659 = vmatprep.subr.mxu0 0.0
    %660 = vmatpush1.msra.mxu0 %v147
    %661 = vmatprep.subr.mxu0 0.0
    %662 = vmatpush1.msra.mxu0 %v148
    %663 = vmatprep.subr.mxu0 0.0
    %664 = vmatpush1.msra.mxu0 %v149
    %665 = vmatprep.subr.mxu0 0.0
    %666 = vmatpush1.msra.mxu0 %v150
    %667 = vmatprep.subr.mxu0 0.0
    %668 = vmatpush1.msra.mxu0 %v151
    %669 = vmatprep.subr.mxu0 0.0
    %670 = vmatpush1.msra.mxu0 %v152
    %671 = vmatprep.subr.mxu0 0.0
    %672 = vmatpush1.msra.mxu0 %v153
    %673 = vmatprep.subr.mxu0 0.0
    %674 = vmatpush1.msra.mxu0 0.0
    %675 = vmatprep.subr.mxu0 0.0
    %676 = vmatpush1.msra.mxu0 0.0
    %677 = vmatprep.subr.mxu0 0.0
    %678 = vmatpush1.msra.mxu0 0.0
    %679 = vmatprep.subr.mxu0 0.0
    %680 = vmatpush1.msra.mxu0 0.0
    %681 = vmatprep.subr.mxu0 0.0
    %682 = vmatpush1.msra.mxu0 0.0
    %683 = vmatprep.subr.mxu0 0.0
    %684 = vmatpush1.msra.mxu0 0.0
    %685 = vmatprep.subr.mxu0 0.0
    %686 = vmatpush1.msra.mxu0 0.0
    %687 = vmatprep.subr.mxu0 0.0
    %688 = vmatpush1.msra.mxu0 0.0
    %689 = vmatprep.subr.mxu0 0.0
    %690 = vmatpush1.msra.mxu0 0.0
    %691 = vmatprep.subr.mxu0 0.0
    %692 = vmatpush1.msra.mxu0 0.0
    %693 = vmatprep.subr.mxu0 0.0
    %694 = vmatpush1.msra.mxu0 0.0
    %695 = vmatprep.subr.mxu0 0.0
    %696 = vmatpush1.msra.mxu0 0.0
    %697 = vmatprep.subr.mxu0 0.0
    %698 = vmatpush1.msra.mxu0 0.0
    %699 = vmatprep.subr.mxu0 0.0
    %700 = vmatpush1.msra.mxu0 0.0
    %701 = vmatprep.subr.mxu0 0.0
    %702 = vmatpush1.msra.mxu0 0.0
    %703 = vmatprep.subr.mxu0 0.0
    %704 = vmatpush1.msra.mxu0 0.0
    %705 = vmatprep.mubr.f32.mxu0 0.0
    %706 = vmatmul.mubr.f32.gmra.mrb[0].mxu0 %v640
    %v707 = vpop.f32.mrb[0].mxu0
    %v708 = vadd.f32 0.0, %v707
    %v709 = vpop.f32.mrb[0].mxu0
    %710 = vdwg.mxu0
    %v711 = vsub.f32 0.0, %v708
    %v712 = vmul.f32 %v711, 1.442695
    %v713 = vpow.pop %v712
    %v714 = vadd.f32 %v634, %v713
    %v715 = vlaneseq
    %v716 = vshrl.u32 %v715, 7
    %v717 = vsub.s32 7, %v716
    %v718 = vrot.slane %v154, %v717
    %v719 = vsub.f32 %v137, %v718
    %v720 = vand.u32 2147483647, %v719
    %721 = vmatprep.subr.mxu0 0.0
    %722 = vmatpush1.msra.mxu0 %v138
    %723 = vmatprep.subr.mxu0 0.0
    %724 = vmatpush1.msra.mxu0 %v139
    %725 = vmatprep.subr.mxu0 0.0
    %726 = vmatpush1.msra.mxu0 %v140
    %727 = vmatprep.subr.mxu0 0.0
    %728 = vmatpush1.msra.mxu0 %v141
    %729 = vmatprep.subr.mxu0 0.0
    %730 = vmatpush1.msra.mxu0 %v142
    %731 = vmatprep.subr.mxu0 0.0
    %732 = vmatpush1.msra.mxu0 %v143
    %733 = vmatprep.subr.mxu0 0.0
    %734 = vmatpush1.msra.mxu0 %v144
    %735 = vmatprep.subr.mxu0 0.0
    %736 = vmatpush1.msra.mxu0 %v145
    %737 = vmatprep.subr.mxu0 0.0
    %738 = vmatpush1.msra.mxu0 %v146
    %739 = vmatprep.subr.mxu0 0.0
    %740 = vmatpush1.msra.mxu0 %v147
    %741 = vmatprep.subr.mxu0 0.0
    %742 = vmatpush1.msra.mxu0 %v148
    %743 = vmatprep.subr.mxu0 0.0
    %744 = vmatpush1.msra.mxu0 %v149
    %745 = vmatprep.subr.mxu0 0.0
    %746 = vmatpush1.msra.mxu0 %v150
    %747 = vmatprep.subr.mxu0 0.0
    %748 = vmatpush1.msra.mxu0 %v151
    %749 = vmatprep.subr.mxu0 0.0
    %750 = vmatpush1.msra.mxu0 %v152
    %751 = vmatprep.subr.mxu0 0.0
    %752 = vmatpush1.msra.mxu0 %v153
    %753 = vmatprep.subr.mxu0 0.0
    %754 = vmatpush1.msra.mxu0 0.0
    %755 = vmatprep.subr.mxu0 0.0
    %756 = vmatpush1.msra.mxu0 0.0
    %757 = vmatprep.subr.mxu0 0.0
    %758 = vmatpush1.msra.mxu0 0.0
    %759 = vmatprep.subr.mxu0 0.0
    %760 = vmatpush1.msra.mxu0 0.0
    %761 = vmatprep.subr.mxu0 0.0
    %762 = vmatpush1.msra.mxu0 0.0
    %763 = vmatprep.subr.mxu0 0.0
    %764 = vmatpush1.msra.mxu0 0.0
    %765 = vmatprep.subr.mxu0 0.0
    %766 = vmatpush1.msra.mxu0 0.0
    %767 = vmatprep.subr.mxu0 0.0
    %768 = vmatpush1.msra.mxu0 0.0
    %769 = vmatprep.subr.mxu0 0.0
    %770 = vmatpush1.msra.mxu0 0.0
    %771 = vmatprep.subr.mxu0 0.0
    %772 = vmatpush1.msra.mxu0 0.0
    %773 = vmatprep.subr.mxu0 0.0
    %774 = vmatpush1.msra.mxu0 0.0
    %775 = vmatprep.subr.mxu0 0.0
    %776 = vmatpush1.msra.mxu0 0.0
    %777 = vmatprep.subr.mxu0 0.0
    %778 = vmatpush1.msra.mxu0 0.0
    %779 = vmatprep.subr.mxu0 0.0
    %780 = vmatpush1.msra.mxu0 0.0
    %781 = vmatprep.subr.mxu0 0.0
    %782 = vmatpush1.msra.mxu0 0.0
    %783 = vmatprep.subr.mxu0 0.0
    %784 = vmatpush1.msra.mxu0 0.0
    %785 = vmatprep.mubr.f32.mxu0 0.0
    %786 = vmatmul.mubr.f32.gmra.mrb[0].mxu0 %v720
    %v787 = vpop.f32.mrb[0].mxu0
    %v788 = vadd.f32 0.0, %v787
    %v789 = vpop.f32.mrb[0].mxu0
    %790 = vdwg.mxu0
    %v791 = vsub.f32 0.0, %v788
    %v792 = vmul.f32 %v791, 1.442695
    %v793 = vpow.pop %v792
    %v794 = vadd.f32 %v714, %v793
    %v795 = vsub.f32 %v794, 1.0
    %796 = vst [vmem:[#allocation9] sm:$0xff] %v795
    // Predicated region
    $region26: #{tpu_custom_call.1} parent=1 // pred_check
      _
    $region27: #{tpu_custom_call.1} parent=1 // pred_check_branch
      %798 = sbr.rel (0) target = $region29
    $region28: #{tpu_custom_call.1} parent=1 // pred_region
      %s800 = ssub.s32 128, 128
      %801 = vsyncadd [#allocation5], %s800
      %s803 = sshll.u32 [#allocation9], 4
      %s804 = int_to_ptr.vmem [resolvable:$true] %s803
      %806 = dma.vmem_to_hbm [thread:$0]  %s804, 128, %s3, [#allocation5]
    $region29: #{tpu_custom_call.1} parent=1 // pred_fallthru
      _
    // Predicated region
    $region30: #{tpu_custom_call.1} parent=1 // pred_check
      _
    $region31: #{tpu_custom_call.1} parent=1 // pred_check_branch
      %808 = sbr.rel (0) target = $region33
    $region32: #{tpu_custom_call.1} parent=1 // pred_region
      %809 = dma.done [#allocation5], 128
    $region33: #{tpu_custom_call.1} parent=1 // pred_fallthru
      _
    %810 = vsyncpa [#allocation4], 1
    %811 = vsyncpa [#allocation7], 1
    %812 = vsyncpa [#allocation5], 1

</llo_original>
